<compile_context>
chip_gen: v5e
topology: v5e:2x2
jax: 0.10.0
libtpu: 0.0.40
codegen_flags: <defaults>
</compile_context>

<pallas_src>
import jax
import jax.numpy as jnp
from jax.experimental import pallas as pl
from jax.experimental.pallas import tpu as pltpu

N_LAYERS_ARG = 6                       # Net2(n=6) -> Linear(2,3),(3,4),(4,5),(5,6)
LAYER_DIMS = [(i, i + 1) for i in range(2, N_LAYERS_ARG)]
L = len(LAYER_DIMS)                    # 4 layers
F_IN = LAYER_DIMS[0][0]                # 2
F_OUT = LAYER_DIMS[-1][1]              # 6
B = 8                                  # batch (8 sublane rows)


def net2_kernel(x_ref, w_ref, o_ref):
    # x_ref: (B, F_IN)   w_ref: (F_IN+1, F_OUT)  [last row = folded bias]
    # o_ref: (B, F_OUT)
    w = w_ref[:F_IN, :]                    # (F_IN, F_OUT)  static ref slice
    b = w_ref[F_IN:F_IN + 1, :]            # (1, F_OUT)     bias row
    o_ref[...] = jnp.dot(x_ref[...], w, preferred_element_type=jnp.float32) + b


def pack_params(weights, biases):
    """Collapse the chain of torch-layout Linear params into one augmented weight.

    weights[l]: (out, in) as in torch.nn.Linear;  per layer y = x @ W.T + b.
    Returns (F_IN+1, F_OUT): rows [0:F_IN] hold W_tot, row F_IN holds b_tot.
    NOTE: this collapse is valid ONLY because Net2 has no nonlinearities
    between its Linear layers.
    """
    w_tot = weights[0].T.astype(jnp.float32)       # (F_IN, d1)
    b_tot = biases[0].astype(jnp.float32)          # (d1,)
    for l in range(1, L):
        wT = weights[l].T.astype(jnp.float32)
        w_tot = w_tot @ wT
        b_tot = b_tot @ wT + biases[l]
    return jnp.concatenate([w_tot, b_tot[None, :]], axis=0)   # (F_IN+1, F_OUT)


@jax.jit
def net2_forward(x, w_aug):
    """x: (B, F_IN) f32.  w_aug: (F_IN+1, F_OUT) packed once at init.  Returns (B, F_OUT)."""
    bsz = x.shape[0]
    # Gridless call: whole-array VMEM blocks, nothing to pipeline at this size.
    # TODO(synk): if the batch ever scales (>=256 rows), add a batch grid with
    # dimension_semantics=("parallel",) to fill the MXU / use both v7x TensorCores.
    return pl.pallas_call(
        net2_kernel,
        out_shape=jax.ShapeDtypeStruct((bsz, F_OUT), jnp.float32),
        in_specs=[
            pl.BlockSpec(memory_space=pltpu.MemorySpace.VMEM),
            pl.BlockSpec(memory_space=pltpu.MemorySpace.VMEM),
        ],
        out_specs=pl.BlockSpec(memory_space=pltpu.MemorySpace.VMEM),
    )(x, w_aug)


def init_params(key):
    """Deterministic init mimicking torch.nn.Linear default (uniform +/- 1/sqrt(fan_in))."""
    weights, biases = [], []
    for l, (fin, fout) in enumerate(LAYER_DIMS):
        kw, kb = jax.random.split(jax.random.fold_in(key, l))
        bound = 1.0 / (fin ** 0.5)
        weights.append(jax.random.uniform(kw, (fout, fin), jnp.float32, -bound, bound))
        biases.append(jax.random.uniform(kb, (fout,), jnp.float32, -bound, bound))
    return weights, biases


if __name__ == "__main__":
    key = jax.random.PRNGKey(0)
    k_x, k_p = jax.random.split(key)
    x = jax.random.normal(k_x, (B, F_IN), jnp.float32)
    weights, biases = init_params(k_p)

    # Parameter packing happens exactly once, outside the jitted forward path.
    w_aug = jax.block_until_ready(pack_params(weights, biases))

    out = jax.block_until_ready(net2_forward(x, w_aug))

    # Pure-JAX reference of the original (uncollapsed) chained linears.
    ref = x
    for l in range(L):
        ref = ref @ weights[l].T + biases[l]

    assert out.shape == (B, F_OUT)
    assert jnp.allclose(out, ref, atol=1e-5, rtol=1e-5)

    print("KERNEL_OK")
</pallas_src>

<mosaic_0001>
module attributes {stable_mosaic.version = 11 : i64} {
  func.func @net2_kernel(%arg0: memref<8x2xf32, #tpu.memory_space<vmem>>, %arg1: memref<3x6xf32, #tpu.memory_space<vmem>>, %arg2: memref<8x6xf32, #tpu.memory_space<vmem>>) attributes {dimension_semantics = [], scalar_prefetch = 0 : i64, scratch_operands = 0 : i64, tpu.core_type = #tpu.core_type<tc>} {
    %c0 = arith.constant 0 : index
    %c0_0 = arith.constant 0 : index
    %0 = vector.load %arg1[%c0, %c0_0] : memref<3x6xf32, #tpu.memory_space<vmem>>, vector<2x6xf32>
    %c2 = arith.constant 2 : index
    %c0_1 = arith.constant 0 : index
    %1 = vector.load %arg1[%c2, %c0_1] : memref<3x6xf32, #tpu.memory_space<vmem>>, vector<1x6xf32>
    %c0_2 = arith.constant 0 : index
    %c0_3 = arith.constant 0 : index
    %2 = vector.load %arg0[%c0_2, %c0_3] : memref<8x2xf32, #tpu.memory_space<vmem>>, vector<8x2xf32>
    %cst = arith.constant dense<0.000000e+00> : vector<8x6xf32>
    %3 = tpu.matmul %2, %0, %cst {dimension_numbers = #tpu.dot_dimension_numbers<[1], [0], [0], [1], [0, 0, 1, 1], [], []>} : vector<8x2xf32>, vector<2x6xf32>, vector<8x6xf32> -> vector<8x6xf32>
    %4 = vector.broadcast %1 : vector<1x6xf32> to vector<8x6xf32>
    %5 = arith.addf %3, %4 : vector<8x6xf32>
    %c0_4 = arith.constant 0 : index
    %c0_5 = arith.constant 0 : index
    %6 = vector.load %arg2[%c0_4, %c0_5] : memref<8x6xf32, #tpu.memory_space<vmem>>, vector<8x6xf32>
    tpu.vector_store %arg2[%c0_4, %c0_5], %5 {strides = array<i32>} : memref<8x6xf32, #tpu.memory_space<vmem>>, vector<8x6xf32>,
    return
  }
}

</mosaic_0001>

<llo_original>
// kernel: net2_forward.1
$region0: #{net2_forward.1}
  #allocation0 [shape = 'u32[]', space=smem, size = 0x4, offset = 0x4, fixed_abs, tag = 'smem constant byte address 0x4 - core index']
  #allocation1 [shape = 'u32[72,128]{1,0:T(1,128)}', space=vmem, size = 0x9000, scoped, tag = 'internal scratch']
  %s0 = inlined_call_operand.vmem [shape: f32[8,2], index: 0, kind: input, shape index: {}]
  %s1 = inlined_call_operand.vmem [shape: f32[3,6], index: 1, kind: input, shape index: {}]
  %s2 = inlined_call_operand.hbm [shape: f32[8,6], index: 2, kind: output, shape index: {}]
  %s3 = sld [smem:[#allocation0]]
  $region18: #{net2_forward.1} parent=0
    _
  %s5 = ssub.s32 1, %s3
  %s6 = scalar_select 0, %s5, %s3
  $region1: #{net2_forward.1} parent=0
    #allocation2 [shape = 'u8[4096]{0}', space=vmem, size = 0x1000, scoped, tag = 'output window, operand 0, single buffered']
    #allocation3 [shape = 's32[1]{0}', space=sflag, size = 0x4, scoped, tag = 'scoped memory for net2_forward.1']
    %7 = vsyncpa [#allocation3], 0
    // Predicated region
    $region2: #{net2_forward.1} parent=1 // pred_check
      _
    $region3: #{net2_forward.1} parent=1 // pred_check_branch
      %9 = sbr.rel (0) target = $region5
    $region4: #{net2_forward.1} parent=1 // pred_region
      _
    $region5: #{net2_forward.1} parent=1 // pred_fallthru
      _
    // Predicated region
    $region6: #{net2_forward.1} parent=1 // pred_check
      _
    $region7: #{net2_forward.1} parent=1 // pred_check_branch
      %11 = sbr.rel (0) target = $region9
    $region8: #{net2_forward.1} parent=1 // pred_region
      _
    $region9: #{net2_forward.1} parent=1 // pred_fallthru
      _
    %v12 = vld [vmem:[%s1] sm:$0x3]
    %v13 = vld [vmem:[%s1 + $0x2] sm:$0x1]
    %v14 = vld [vmem:[%s0] sm:$0xff]
    %v15 = vperm.slane %v13, 0
    %vm16 = vcmask 15360
    %v18 = vsel %vm16, %v14, 0
    %vm20 = vcmask 1041408
    %v22 = vsel %vm20, %v12, 0
    %24 = vmatpush.msra.mxu0 0.0
    %25 = vmatpush.msra.mxu0 0.0
    %26 = vmatpush.msra.mxu0 0.0
    %27 = vmatpush.msra.mxu0 0.0
    %28 = vmatpush.msra.mxu0 0.0
    %29 = vmatpush.msra.mxu0 0.0
    %30 = vmatpush.msra.mxu0 0.0
    %31 = vmatpush.msra.mxu0 0.0
    %32 = vmatpush.msra.mxu0 0.0
    %33 = vmatpush.msra.mxu0 0.0
    %34 = vmatpush.msra.mxu0 0.0
    %35 = vmatpush.msra.mxu0 0.0
    %36 = vmatpush.msra.mxu0 0.0
    %37 = vmatpush.msra.mxu0 0.0
    %38 = vmatpush.msra.mxu0 0.0
    %39 = vmatpush.msra.mxu0 %v22
    %40 = vmatmul.f32.gmra.mxu0 %v18
    %v41 = vpop.f32.mrf.mxu0
    %v42 = vadd.f32 %v15, %v41
    %43 = vdwg.mxu0
    %vm44 = vcmask 48128
    %45 = vst.msk [vmem:[#allocation2] sm:$0xff] %vm44, %v42
    // Predicated region
    $region10: #{net2_forward.1} parent=1 // pred_check
      _
    $region11: #{net2_forward.1} parent=1 // pred_check_branch
      %47 = sbr.rel (0) target = $region13
    $region12: #{net2_forward.1} parent=1 // pred_region
      %49 = vsyncadd [#allocation3], 0
      %s51 = sshll.u32 [#allocation2], 4
      %s52 = int_to_ptr.vmem [resolvable:$true] %s51
      %s53 = sshll.u32 %s2, 4
      %s54 = int_to_ptr.hbm [resolvable:$true] %s53
      %56 = dma.vmem_to_hbm [thread:$0]  %s52, 128, %s54, [#allocation3]
    $region13: #{net2_forward.1} parent=1 // pred_fallthru
      _
    // Predicated region
    $region14: #{net2_forward.1} parent=1 // pred_check
      _
    $region15: #{net2_forward.1} parent=1 // pred_check_branch
      %58 = sbr.rel (0) target = $region17
    $region16: #{net2_forward.1} parent=1 // pred_region
      %60 = dma.done [#allocation3], 128
    $region17: #{net2_forward.1} parent=1 // pred_fallthru
      _
    %61 = vsyncpa [#allocation3], 1

</llo_original>
